<compile_context>
chip_gen: v7x
topology: tpu7x:2x2x1
jax: 0.10.0
libtpu: 0.0.40
codegen_flags: <defaults>
</compile_context>

<pallas_src>
import functools

import jax
import jax.numpy as jnp
from jax.experimental import pallas as pl
from jax.experimental.pallas import tpu as pltpu


# ---------------------------------------------------------------------------
# Single-step LSTM cell (matches My_LSTM_cell.forward)
# ---------------------------------------------------------------------------
def _lstm_cell_kernel(x_ref, h_ref, c_ref, w_ref, r_ref, b_ref,
                      h_next_ref, c_next_ref, *, hidden):
    # Two lane-dense MXU dots on resident VMEM tiles + one bias add.
    z = (jnp.dot(x_ref[...], w_ref[...], preferred_element_type=jnp.float32)
         + jnp.dot(h_ref[...], r_ref[...], preferred_element_type=jnp.float32)
         + b_ref[...])

    # ONE full-width transcendental pass (EUP); candidate gate recovered via
    # tanh(x) = 2*sigmoid(2x) - 1 (weights pre-scaled by 2 in pack_params).
    sig = jax.nn.sigmoid(z)
    H = hidden
    i = sig[:, 0 * H:1 * H]                    # input gate
    f = sig[:, 1 * H:2 * H]                    # forget gate
    g = 2.0 * sig[:, 2 * H:3 * H] - 1.0        # candidate (== tanh)
    o = sig[:, 3 * H:4 * H]                    # output gate

    c_next = g * i + f * c_ref[...]
    h_next = o * jnp.tanh(c_next)

    h_next_ref[...] = h_next.astype(h_next_ref.dtype)
    c_next_ref[...] = c_next.astype(c_next_ref.dtype)


def lstm_cell_forward(x, h, c_prev, packed):
    """One LSTM-cell step.

    packed: {"w": (I, 4H), "r": (H, 4H), "b": (1, 4H)} from pack_params.
    Returns (h_next, c_next), each (B, H) float32.
    """
    B = x.shape[0]
    H = packed["r"].shape[0]
    cd = packed["w"].dtype                      # compute dtype for MXU operands

    vmem = pl.BlockSpec(memory_space=pltpu.VMEM)
    return pl.pallas_call(
        functools.partial(_lstm_cell_kernel, hidden=H),
        out_shape=(
            jax.ShapeDtypeStruct((B, H), jnp.float32),
            jax.ShapeDtypeStruct((B, H), jnp.float32),
        ),
        in_specs=[vmem] * 6,
        out_specs=(vmem, vmem),
    )(x.astype(cd), h.astype(cd), c_prev.astype(jnp.float32),
      packed["w"], packed["r"], packed["b"])


# ---------------------------------------------------------------------------
# Fused recurrence: whole sequence in ONE grid-less pallas_call
# ---------------------------------------------------------------------------
def _lstm_seq_kernel(x_ref, h0_ref, c0_ref, w_ref, r_ref, b_ref,
                     h_out_ref, c_out_ref, zx_sc, h_sc, c_sc, *,
                     seq_len, batch, hidden):
    H, B = hidden, batch

    # Hoisted input projection (+bias): one lane-dense (T*B, I) @ (I, 4H) GEMM
    # at M = T*B (better MXU fill), entirely off the serial critical path.
    zx_sc[...] = (jnp.dot(x_ref[...], w_ref[...],
                          preferred_element_type=jnp.float32) + b_ref[...])

    # h/c carries live in f32 VMEM scratch even on the bf16 path.
    h_sc[...] = h0_ref[...]
    c_sc[...] = c0_ref[...]
    r = r_ref[...]                               # hoist weight load out of loop

    def step(t, carry):
        off = pl.multiple_of(t * B, B)
        zx_t = zx_sc[pl.ds(off, B), :]           # (B, 4H), lane-dense
        # Only the recurrent dot remains on the per-step critical path.
        z = zx_t + jnp.dot(h_sc[...].astype(r.dtype), r,
                           preferred_element_type=jnp.float32)

        sig = jax.nn.sigmoid(z)                  # single full-vreg EUP pass
        i = sig[:, 0 * H:1 * H]
        f = sig[:, 1 * H:2 * H]
        g = 2.0 * sig[:, 2 * H:3 * H] - 1.0      # tanh via pre-scaled weights
        o = sig[:, 3 * H:4 * H]

        c_next = g * i + f * c_sc[...]
        h_next = o * jnp.tanh(c_next)

        h_sc[...] = h_next                       # f32 carries
        c_sc[...] = c_next
        # Outputs staged in VMEM (full-extent blocks) -> one writeback at end.
        h_out_ref[t] = h_next.astype(h_out_ref.dtype)
        c_out_ref[t] = c_next.astype(c_out_ref.dtype)
        return carry

    jax.lax.fori_loop(0, seq_len, step, 0, unroll=True)


def lstm_sequence_forward(x_seq, h0, c0, packed):
    """Apply the cell over x_seq (T, B, I) in one pallas_call.

    Weights, x, zx, carries and outputs are all VMEM-resident (< 100 KiB at
    these shapes, trivially within the v7x 32 MiB default scoped limit).
    Returns (h_seq, c_seq), each (T, B, H) float32.
    """
    T, B, I = x_seq.shape
    H = packed["r"].shape[0]
    cd = packed["w"].dtype

    # Wrapper-side reshape only (free): present x as a (T*B, I) slab so the
    # hoisted GEMM runs at M = T*B.
    x2 = x_seq.reshape(T * B, I).astype(cd)

    vmem = pl.BlockSpec(memory_space=pltpu.VMEM)
    return pl.pallas_call(
        functools.partial(_lstm_seq_kernel, seq_len=T, batch=B, hidden=H),
        out_shape=(
            jax.ShapeDtypeStruct((T, B, H), jnp.float32),
            jax.ShapeDtypeStruct((T, B, H), jnp.float32),
        ),
        in_specs=[vmem] * 6,
        out_specs=(vmem, vmem),
        scratch_shapes=[
            pltpu.VMEM((T * B, 4 * H), jnp.float32),   # hoisted x@W + b
            pltpu.VMEM((B, H), jnp.float32),           # h carry (f32 always)
            pltpu.VMEM((B, H), jnp.float32),           # c carry
        ],
    )(x2, h0.astype(jnp.float32), c0.astype(jnp.float32),
      packed["w"], packed["r"], packed["b"])


# ---------------------------------------------------------------------------
# Parameter prep / pure-JAX reference
# ---------------------------------------------------------------------------
def pack_params(params, compute_dtype=jnp.float32):
    """Pack the 12 per-gate tensors into the fused layout used by the kernels.

    w*: (I, H) (= torch Linear.weight.T)   r*: (H, H)   b*: (1, H)
    Gate order along 4H: [input, forget, candidate, output].  The candidate
    columns are pre-scaled by 2 so the kernels can use tanh(x)=2*sigmoid(2x)-1.
    Weight casts are materialized here, once, not per call.
    """
    w = jnp.concatenate(
        [params["wi"], params["wf"], 2.0 * params["wg"], params["wo"]], axis=1)
    r = jnp.concatenate(
        [params["ri"], params["rf"], 2.0 * params["rg"], params["ro"]], axis=1)
    b = jnp.concatenate(
        [params["bi"], params["bf"], 2.0 * params["bg"], params["bo"]], axis=1)
    return {"w": w.astype(compute_dtype),
            "r": r.astype(compute_dtype),
            "b": b.astype(jnp.float32)}          # gate math stays in f32


def _reference(x, h, c_prev, params):
    def affine(w, b, r):
        return x @ w + h @ r + b

    i = jax.nn.sigmoid(affine(params["wi"], params["bi"], params["ri"]))
    f = jax.nn.sigmoid(affine(params["wf"], params["bf"], params["rf"]))
    k = jnp.tanh(affine(params["wg"], params["bg"], params["rg"]))
    o = jax.nn.sigmoid(affine(params["wo"], params["bo"], params["ro"]))
    c_next = k * i + f * c_prev
    h_next = o * jnp.tanh(c_next)
    return h_next, c_next


def make_params(key, input_length, hidden_length):
    """Deterministic synthetic parameters (nn.Linear shapes, stored transposed)."""
    names = ["wf", "rf", "wi", "ri", "wg", "rg", "wo", "ro", "bf", "bi", "bg", "bo"]
    keys = jax.random.split(key, len(names))
    p = {}
    scale = 1.0 / jnp.sqrt(jnp.float32(hidden_length))
    for n, k in zip(names, keys):
        if n.startswith("w"):
            shape = (input_length, hidden_length)
        elif n.startswith("r"):
            shape = (hidden_length, hidden_length)
        else:
            shape = (1, hidden_length)
        p[n] = jax.random.uniform(k, shape, jnp.float32, -scale, scale)
    return p


if __name__ == "__main__":
    B = 8
    INPUT_LEN = 16
    HIDDEN_LEN = 32        # 4H = 128 -> gate block exactly fills the lane axis
    SEQ_LEN = 8

    key = jax.random.PRNGKey(0)
    kx, kh, kc, kp, ks = jax.random.split(key, 5)

    x = jax.random.normal(kx, (B, INPUT_LEN), jnp.float32)
    h = jax.random.normal(kh, (B, HIDDEN_LEN), jnp.float32)
    c_prev = jax.random.normal(kc, (B, HIDDEN_LEN), jnp.float32)
    x_seq = jax.random.normal(ks, (SEQ_LEN, B, INPUT_LEN), jnp.float32)

    params = make_params(kp, INPUT_LEN, HIDDEN_LEN)
    packed_f32 = pack_params(params, jnp.float32)
    packed_bf16 = pack_params(params, jnp.bfloat16)   # skip this path on v5e

    cell = jax.jit(lstm_cell_forward)
    seq = jax.jit(lstm_sequence_forward)

    # ---- single-step cell, f32 MXU path ----
    h_next, c_next = cell(x, h, c_prev, packed_f32)
    jax.block_until_ready((h_next, c_next))
    h_ref, c_ref = _reference(x, h, c_prev, params)
    assert jnp.allclose(h_next, h_ref, atol=2e-5, rtol=1e-5)
    assert jnp.allclose(c_next, c_ref, atol=2e-5, rtol=1e-5)

    # ---- single-step cell, bf16 operands + f32 accumulation (v6e/v7x) ----
    h_bf, c_bf = cell(x, h, c_prev, packed_bf16)
    jax.block_until_ready((h_bf, c_bf))
    assert jnp.allclose(h_bf, h_ref, atol=5e-2, rtol=5e-2)
    assert jnp.allclose(c_bf, c_ref, atol=5e-2, rtol=5e-2)

    # ---- fused recurrence: whole sequence in one grid-less pallas_call ----
    h_seq, c_seq = seq(x_seq, h, c_prev, packed_f32)
    jax.block_until_ready((h_seq, c_seq))

    def scan_step(carry, x_t):
        hh, cc = carry
        hn, cn = _reference(x_t, hh, cc, params)
        return (hn, cn), (hn, cn)

    (_, _), (h_seq_ref, c_seq_ref) = jax.lax.scan(scan_step, (h, c_prev), x_seq)
    assert jnp.allclose(h_seq, h_seq_ref, atol=1e-4, rtol=1e-4)
    assert jnp.allclose(c_seq, c_seq_ref, atol=1e-4, rtol=1e-4)

    # ---- bf16 sequence path: f32 carries keep rounding from compounding ----
    h_seq_bf, c_seq_bf = seq(x_seq, h, c_prev, packed_bf16)
    jax.block_until_ready((h_seq_bf, c_seq_bf))
    assert jnp.allclose(h_seq_bf, h_seq_ref, atol=1e-1, rtol=1e-1)
    assert jnp.allclose(c_seq_bf, c_seq_ref, atol=1e-1, rtol=1e-1)

    print("KERNEL_OK")
</pallas_src>

<mosaic_0001>
module attributes {stable_mosaic.version = 11 : i64} {
  func.func @_lstm_cell_kernel(%arg0: memref<8x16xf32, #tpu.memory_space<vmem>>, %arg1: memref<8x32xf32, #tpu.memory_space<vmem>>, %arg2: memref<8x32xf32, #tpu.memory_space<vmem>>, %arg3: memref<16x128xf32, #tpu.memory_space<vmem>>, %arg4: memref<32x128xf32, #tpu.memory_space<vmem>>, %arg5: memref<1x128xf32, #tpu.memory_space<vmem>>, %arg6: memref<8x32xf32, #tpu.memory_space<vmem>>, %arg7: memref<8x32xf32, #tpu.memory_space<vmem>>) attributes {dimension_semantics = [], scalar_prefetch = 0 : i64, scratch_operands = 0 : i64, tpu.core_type = #tpu.core_type<tc>} {
    %c0 = arith.constant 0 : index
    %c0_0 = arith.constant 0 : index
    %0 = vector.load %arg0[%c0, %c0_0] : memref<8x16xf32, #tpu.memory_space<vmem>>, vector<8x16xf32>
    %c0_1 = arith.constant 0 : index
    %c0_2 = arith.constant 0 : index
    %1 = vector.load %arg3[%c0_1, %c0_2] : memref<16x128xf32, #tpu.memory_space<vmem>>, vector<16x128xf32>
    %cst = arith.constant dense<0.000000e+00> : vector<8x128xf32>
    %2 = tpu.matmul %0, %1, %cst {dimension_numbers = #tpu.dot_dimension_numbers<[1], [0], [0], [1], [0, 0, 1, 1], [], []>} : vector<8x16xf32>, vector<16x128xf32>, vector<8x128xf32> -> vector<8x128xf32>
    %c0_3 = arith.constant 0 : index
    %c0_4 = arith.constant 0 : index
    %3 = vector.load %arg1[%c0_3, %c0_4] : memref<8x32xf32, #tpu.memory_space<vmem>>, vector<8x32xf32>
    %c0_5 = arith.constant 0 : index
    %c0_6 = arith.constant 0 : index
    %4 = vector.load %arg4[%c0_5, %c0_6] : memref<32x128xf32, #tpu.memory_space<vmem>>, vector<32x128xf32>
    %cst_7 = arith.constant dense<0.000000e+00> : vector<8x128xf32>
    %5 = tpu.matmul %3, %4, %cst_7 {dimension_numbers = #tpu.dot_dimension_numbers<[1], [0], [0], [1], [0, 0, 1, 1], [], []>} : vector<8x32xf32>, vector<32x128xf32>, vector<8x128xf32> -> vector<8x128xf32>
    %6 = arith.addf %2, %5 : vector<8x128xf32>
    %c0_8 = arith.constant 0 : index
    %c0_9 = arith.constant 0 : index
    %7 = vector.load %arg5[%c0_8, %c0_9] : memref<1x128xf32, #tpu.memory_space<vmem>>, vector<1x128xf32>
    %8 = vector.broadcast %7 : vector<1x128xf32> to vector<8x128xf32>
    %9 = arith.addf %6, %8 : vector<8x128xf32>
    %10 = arith.negf %9 : vector<8x128xf32>
    %11 = math.exp %10 : vector<8x128xf32>
    %cst_10 = arith.constant 1.000000e+00 : f32
    %12 = vector.broadcast %cst_10 : f32 to vector<8x128xf32>
    %13 = arith.addf %12, %11 : vector<8x128xf32>
    %14 = arith.divf %12, %13 : vector<8x128xf32>
    %15 = vector.extract_strided_slice %14 {offsets = [0, 0], sizes = [8, 32], strides = [1, 1]} : vector<8x128xf32> to vector<8x32xf32>
    %16 = vector.extract_strided_slice %14 {offsets = [0, 32], sizes = [8, 32], strides = [1, 1]} : vector<8x128xf32> to vector<8x32xf32>
    %17 = vector.extract_strided_slice %14 {offsets = [0, 64], sizes = [8, 32], strides = [1, 1]} : vector<8x128xf32> to vector<8x32xf32>
    %cst_11 = arith.constant 2.000000e+00 : f32
    %18 = vector.broadcast %cst_11 : f32 to vector<8x32xf32>
    %19 = arith.mulf %18, %17 : vector<8x32xf32>
    %cst_12 = arith.constant 1.000000e+00 : f32
    %20 = vector.broadcast %cst_12 : f32 to vector<8x32xf32>
    %21 = arith.subf %19, %20 : vector<8x32xf32>
    %22 = vector.extract_strided_slice %14 {offsets = [0, 96], sizes = [8, 32], strides = [1, 1]} : vector<8x128xf32> to vector<8x32xf32>
    %23 = arith.mulf %21, %15 : vector<8x32xf32>
    %c0_13 = arith.constant 0 : index
    %c0_14 = arith.constant 0 : index
    %24 = vector.load %arg2[%c0_13, %c0_14] : memref<8x32xf32, #tpu.memory_space<vmem>>, vector<8x32xf32>
    %25 = arith.mulf %16, %24 : vector<8x32xf32>
    %26 = arith.addf %23, %25 : vector<8x32xf32>
    %27 = math.tanh %26 : vector<8x32xf32>
    %28 = arith.mulf %22, %27 : vector<8x32xf32>
    %c0_15 = arith.constant 0 : index
    %c0_16 = arith.constant 0 : index
    %29 = vector.load %arg6[%c0_15, %c0_16] : memref<8x32xf32, #tpu.memory_space<vmem>>, vector<8x32xf32>
    tpu.vector_store %arg6[%c0_15, %c0_16], %28 {strides = array<i32>} : memref<8x32xf32, #tpu.memory_space<vmem>>, vector<8x32xf32>,
    %c0_17 = arith.constant 0 : index
    %c0_18 = arith.constant 0 : index
    %30 = vector.load %arg7[%c0_17, %c0_18] : memref<8x32xf32, #tpu.memory_space<vmem>>, vector<8x32xf32>
    tpu.vector_store %arg7[%c0_17, %c0_18], %26 {strides = array<i32>} : memref<8x32xf32, #tpu.memory_space<vmem>>, vector<8x32xf32>,
    return
  }
}

</mosaic_0001>

<llo_original>
// kernel: lstm_cell_forward.1
$region0: #{lstm_cell_forward.1}
  #allocation0 [shape = 'u32[]', space=smem, size = 0x4, offset = 0x4, fixed_abs, tag = 'smem constant byte address 0x4 - core index']
  #allocation1 [shape = 'u32[144,128]{1,0:T(1,128)}', space=vmem, size = 0x12000, scoped, tag = 'internal scratch']
  %s0 = inlined_call_operand.hbm [shape: f32[8,16], index: 0, kind: input, shape index: {}]
  %s1 = inlined_call_operand.hbm [shape: f32[8,32], index: 1, kind: input, shape index: {}]
  %s2 = inlined_call_operand.hbm [shape: f32[8,32], index: 2, kind: input, shape index: {}]
  %s3 = inlined_call_operand.vmem [shape: f32[16,128], index: 3, kind: input, shape index: {}]
  %s4 = inlined_call_operand.hbm [shape: f32[32,128], index: 4, kind: input, shape index: {}]
  %s5 = inlined_call_operand.vmem [shape: f32[1,128], index: 5, kind: input, shape index: {}]
  %s6 = inlined_call_operand.hbm [shape: f32[8,32], index: 6, kind: output, shape index: {0}]
  %s7 = inlined_call_operand.hbm [shape: f32[8,32], index: 7, kind: output, shape index: {1}]
  %8 = xla_tuple %s6, %s7
  %s9 = sld [smem:[#allocation0]]
  $region58: #{lstm_cell_forward.1} parent=0
    _
  %s11 = ssub.s32 1, %s9
  %s12 = scalar_select 0, %s11, %s9
  $region1: #{lstm_cell_forward.1} parent=0
    #allocation2 [shape = 'u8[4096]{0}', space=vmem, size = 0x1000, scoped, tag = 'input window, operand 0, single buffered']
    #allocation3 [shape = 's32[1]{0}', space=sflag, size = 0x4, scoped, tag = 'scoped memory for lstm_cell_forward.1']
    #allocation4 [shape = 's32[1]{0}', space=sflag, size = 0x4, scoped, tag = 'scoped memory for lstm_cell_forward.1']
    #allocation5 [shape = 'u8[4096]{0}', space=vmem, size = 0x1000, scoped, tag = 'input window, operand 1, single buffered']
    #allocation6 [shape = 's32[1]{0}', space=sflag, size = 0x4, scoped, tag = 'scoped memory for lstm_cell_forward.1']
    #allocation7 [shape = 'u8[4096]{0}', space=vmem, size = 0x1000, scoped, tag = 'input window, operand 2, single buffered']
    #allocation8 [shape = 'u8[16384]{0}', space=vmem, size = 0x4000, scoped, tag = 'input window, operand 4, single buffered']
    #allocation9 [shape = 's32[1]{0}', space=sflag, size = 0x4, scoped, tag = 'scoped memory for lstm_cell_forward.1']
    #allocation10 [shape = 'u8[4096]{0}', space=vmem, size = 0x1000, scoped, tag = 'output window, operand 0, single buffered']
    #allocation11 [shape = 'u8[4096]{0}', space=vmem, size = 0x1000, scoped, tag = 'output window, operand 1, single buffered']
    #allocation12 [shape = 's32[1]{0}', space=sflag, size = 0x4, scoped, tag = 'scoped memory for lstm_cell_forward.1']
    %13 = vsyncpa [#allocation3], 0
    %14 = vsyncpa [#allocation6], 0
    %15 = vsyncpa [#allocation9], 0
    %16 = vsyncpa [#allocation4], 0
    %17 = vsyncpa [#allocation12], 0
    // Predicated region
    $region2: #{lstm_cell_forward.1} parent=1 // pred_check
      _
    $region3: #{lstm_cell_forward.1} parent=1 // pred_check_branch
      %19 = sbr.rel (0) target = $region5
    $region4: #{lstm_cell_forward.1} parent=1 // pred_region
      %s21 = ssub.s32 128, 128
      %22 = vsyncadd [#allocation3], %s21
      %s24 = sshll.u32 [#allocation2], 4
      %s25 = int_to_ptr.vmem [resolvable:$true] %s24
      %27 = dma.hbm_to_vmem [thread:$0]  %s0, 128, %s25, [#allocation3]
    $region5: #{lstm_cell_forward.1} parent=1 // pred_fallthru
      _
    // Predicated region
    $region6: #{lstm_cell_forward.1} parent=1 // pred_check
      _
    $region7: #{lstm_cell_forward.1} parent=1 // pred_check_branch
      %29 = sbr.rel (0) target = $region9
    $region8: #{lstm_cell_forward.1} parent=1 // pred_region
      %s31 = ssub.s32 128, 128
      %32 = vsyncadd [#allocation6], %s31
      %s34 = sshll.u32 [#allocation5], 4
      %s35 = int_to_ptr.vmem [resolvable:$true] %s34
      %37 = dma.hbm_to_vmem [thread:$0]  %s1, 128, %s35, [#allocation6]
    $region9: #{lstm_cell_forward.1} parent=1 // pred_fallthru
      _
    // Predicated region
    $region10: #{lstm_cell_forward.1} parent=1 // pred_check
      _
    $region11: #{lstm_cell_forward.1} parent=1 // pred_check_branch
      %39 = sbr.rel (0) target = $region13
    $region12: #{lstm_cell_forward.1} parent=1 // pred_region
      %s41 = ssub.s32 128, 128
      %42 = vsyncadd [#allocation6], %s41
      %s44 = sshll.u32 [#allocation7], 4
      %s45 = int_to_ptr.vmem [resolvable:$true] %s44
      %47 = dma.hbm_to_vmem [thread:$0]  %s2, 128, %s45, [#allocation6]
    $region13: #{lstm_cell_forward.1} parent=1 // pred_fallthru
      _
    // Predicated region
    $region14: #{lstm_cell_forward.1} parent=1 // pred_check
      _
    $region15: #{lstm_cell_forward.1} parent=1 // pred_check_branch
      %49 = sbr.rel (0) target = $region17
    $region16: #{lstm_cell_forward.1} parent=1 // pred_region
      _
    $region17: #{lstm_cell_forward.1} parent=1 // pred_fallthru
      _
    // Predicated region
    $region18: #{lstm_cell_forward.1} parent=1 // pred_check
      _
    $region19: #{lstm_cell_forward.1} parent=1 // pred_check_branch
      %51 = sbr.rel (0) target = $region21
    $region20: #{lstm_cell_forward.1} parent=1 // pred_region
      %s53 = ssub.s32 512, 512
      %54 = vsyncadd [#allocation9], %s53
      %s55 = sshll.u32 [#allocation8], 4
      %s56 = int_to_ptr.vmem [resolvable:$true] %s55
      %61 = dma.hbm_to_vmem [thread:$0]  %s4, 512, %s56, [#allocation9], 128, 128, 8
    $region21: #{lstm_cell_forward.1} parent=1 // pred_fallthru
      _
    // Predicated region
    $region22: #{lstm_cell_forward.1} parent=1 // pred_check
      _
    $region23: #{lstm_cell_forward.1} parent=1 // pred_check_branch
      %63 = sbr.rel (0) target = $region25
    $region24: #{lstm_cell_forward.1} parent=1 // pred_region
      _
    $region25: #{lstm_cell_forward.1} parent=1 // pred_fallthru
      _
    // Predicated region
    $region26: #{lstm_cell_forward.1} parent=1 // pred_check
      _
    $region27: #{lstm_cell_forward.1} parent=1 // pred_check_branch
      %65 = sbr.rel (0) target = $region29
    $region28: #{lstm_cell_forward.1} parent=1 // pred_region
      %66 = dma.done [#allocation3], 128
    $region29: #{lstm_cell_forward.1} parent=1 // pred_fallthru
      _
    // Predicated region
    $region30: #{lstm_cell_forward.1} parent=1 // pred_check
      _
    $region31: #{lstm_cell_forward.1} parent=1 // pred_check_branch
      %68 = sbr.rel (0) target = $region33
    $region32: #{lstm_cell_forward.1} parent=1 // pred_region
      %69 = dma.done [#allocation6], 128
    $region33: #{lstm_cell_forward.1} parent=1 // pred_fallthru
      _
    // Predicated region
    $region34: #{lstm_cell_forward.1} parent=1 // pred_check
      _
    $region35: #{lstm_cell_forward.1} parent=1 // pred_check_branch
      %71 = sbr.rel (0) target = $region37
    $region36: #{lstm_cell_forward.1} parent=1 // pred_region
      %72 = dma.done [#allocation6], 128
    $region37: #{lstm_cell_forward.1} parent=1 // pred_fallthru
      _
    // Predicated region
    $region38: #{lstm_cell_forward.1} parent=1 // pred_check
      _
    $region39: #{lstm_cell_forward.1} parent=1 // pred_check_branch
      %74 = sbr.rel (0) target = $region41
    $region40: #{lstm_cell_forward.1} parent=1 // pred_region
      %75 = dma.done [#allocation9], 512
    $region41: #{lstm_cell_forward.1} parent=1 // pred_fallthru
      _
    %v76 = vld [vmem:[#allocation2] sm:$0xff]
    %v77 = vld [vmem:[%s3] sm:$0xff]
    %v78 = vld [vmem:[%s3 + $0x8] sm:$0xff]
    %v79 = vld [vmem:[#allocation5] sm:$0xff]
    %v80 = vld [vmem:[#allocation8] sm:$0xff]
    %v81 = vld [vmem:[#allocation8 + $0x8] sm:$0xff]
    %v82 = vld [vmem:[#allocation8 + $0x10] sm:$0xff]
    %v83 = vld [vmem:[#allocation8 + $0x18] sm:$0xff]
    %vm84 = vcmask 261120
    %v86 = vsel %vm84, %v79, 0
    %88 = vmatprep.subr.mxu0 0.0
    %89 = vmatpush1.msra.mxu0 %v80
    %90 = vmatprep.subr.mxu0 0.0
    %91 = vmatpush1.msra.mxu0 %v81
    %92 = vmatprep.subr.mxu0 0.0
    %93 = vmatpush1.msra.mxu0 %v82
    %94 = vmatprep.subr.mxu0 0.0
    %95 = vmatpush1.msra.mxu0 %v83
    %96 = vmatprep.subr.mxu0 0.0
    %97 = vmatpush1.msra.mxu0 0.0
    %98 = vmatprep.subr.mxu0 0.0
    %99 = vmatpush1.msra.mxu0 0.0
    %100 = vmatprep.subr.mxu0 0.0
    %101 = vmatpush1.msra.mxu0 0.0
    %102 = vmatprep.subr.mxu0 0.0
    %103 = vmatpush1.msra.mxu0 0.0
    %104 = vmatprep.subr.mxu0 0.0
    %105 = vmatpush1.msra.mxu0 0.0
    %106 = vmatprep.subr.mxu0 0.0
    %107 = vmatpush1.msra.mxu0 0.0
    %108 = vmatprep.subr.mxu0 0.0
    %109 = vmatpush1.msra.mxu0 0.0
    %110 = vmatprep.subr.mxu0 0.0
    %111 = vmatpush1.msra.mxu0 0.0
    %112 = vmatprep.subr.mxu0 0.0
    %113 = vmatpush1.msra.mxu0 0.0
    %114 = vmatprep.subr.mxu0 0.0
    %115 = vmatpush1.msra.mxu0 0.0
    %116 = vmatprep.subr.mxu0 0.0
    %117 = vmatpush1.msra.mxu0 0.0
    %118 = vmatprep.subr.mxu0 0.0
    %119 = vmatpush1.msra.mxu0 0.0
    %120 = vmatprep.subr.mxu0 0.0
    %121 = vmatpush1.msra.mxu0 0.0
    %122 = vmatprep.subr.mxu0 0.0
    %123 = vmatpush1.msra.mxu0 0.0
    %124 = vmatprep.subr.mxu0 0.0
    %125 = vmatpush1.msra.mxu0 0.0
    %126 = vmatprep.subr.mxu0 0.0
    %127 = vmatpush1.msra.mxu0 0.0
    %128 = vmatprep.subr.mxu0 0.0
    %129 = vmatpush1.msra.mxu0 0.0
    %130 = vmatprep.subr.mxu0 0.0
    %131 = vmatpush1.msra.mxu0 0.0
    %132 = vmatprep.subr.mxu0 0.0
    %133 = vmatpush1.msra.mxu0 0.0
    %134 = vmatprep.subr.mxu0 0.0
    %135 = vmatpush1.msra.mxu0 0.0
    %136 = vmatprep.subr.mxu0 0.0
    %137 = vmatpush1.msra.mxu0 0.0
    %138 = vmatprep.subr.mxu0 0.0
    %139 = vmatpush1.msra.mxu0 0.0
    %140 = vmatprep.subr.mxu0 0.0
    %141 = vmatpush1.msra.mxu0 0.0
    %142 = vmatprep.subr.mxu0 0.0
    %143 = vmatpush1.msra.mxu0 0.0
    %144 = vmatprep.subr.mxu0 0.0
    %145 = vmatpush1.msra.mxu0 0.0
    %146 = vmatprep.subr.mxu0 0.0
    %147 = vmatpush1.msra.mxu0 0.0
    %148 = vmatprep.subr.mxu0 0.0
    %149 = vmatpush1.msra.mxu0 0.0
    %150 = vmatprep.subr.mxu0 0.0
    %151 = vmatpush1.msra.mxu0 0.0
    %152 = vmatprep.mubr.f32.mxu0 0.0
    %153 = vmatmul.mubr.f32.gmra.mrb[0].mxu0 %v86
    %v154 = vpop.f32.mrb[0].mxu0
    %v155 = vadd.f32 0.0, %v154
    %v156 = vpop.f32.mrb[0].mxu0
    %157 = vdwg.mxu0
    %vm158 = vcmask 130048
    %v160 = vsel %vm158, %v76, 0
    %162 = vmatprep.subr.mxu0 0.0
    %163 = vmatpush1.msra.mxu0 %v77
    %164 = vmatprep.subr.mxu0 0.0
    %165 = vmatpush1.msra.mxu0 %v78
    %166 = vmatprep.subr.mxu0 0.0
    %167 = vmatpush1.msra.mxu0 0.0
    %168 = vmatprep.subr.mxu0 0.0
    %169 = vmatpush1.msra.mxu0 0.0
    %170 = vmatprep.subr.mxu0 0.0
    %171 = vmatpush1.msra.mxu0 0.0
    %172 = vmatprep.subr.mxu0 0.0
    %173 = vmatpush1.msra.mxu0 0.0
    %174 = vmatprep.subr.mxu0 0.0
    %175 = vmatpush1.msra.mxu0 0.0
    %176 = vmatprep.subr.mxu0 0.0
    %177 = vmatpush1.msra.mxu0 0.0
    %178 = vmatprep.subr.mxu0 0.0
    %179 = vmatpush1.msra.mxu0 0.0
    %180 = vmatprep.subr.mxu0 0.0
    %181 = vmatpush1.msra.mxu0 0.0
    %182 = vmatprep.subr.mxu0 0.0
    %183 = vmatpush1.msra.mxu0 0.0
    %184 = vmatprep.subr.mxu0 0.0
    %185 = vmatpush1.msra.mxu0 0.0
    %186 = vmatprep.subr.mxu0 0.0
    %187 = vmatpush1.msra.mxu0 0.0
    %188 = vmatprep.subr.mxu0 0.0
    %189 = vmatpush1.msra.mxu0 0.0
    %190 = vmatprep.subr.mxu0 0.0
    %191 = vmatpush1.msra.mxu0 0.0
    %192 = vmatprep.subr.mxu0 0.0
    %193 = vmatpush1.msra.mxu0 0.0
    %194 = vmatprep.subr.mxu0 0.0
    %195 = vmatpush1.msra.mxu0 0.0
    %196 = vmatprep.subr.mxu0 0.0
    %197 = vmatpush1.msra.mxu0 0.0
    %198 = vmatprep.subr.mxu0 0.0
    %199 = vmatpush1.msra.mxu0 0.0
    %200 = vmatprep.subr.mxu0 0.0
    %201 = vmatpush1.msra.mxu0 0.0
    %202 = vmatprep.subr.mxu0 0.0
    %203 = vmatpush1.msra.mxu0 0.0
    %204 = vmatprep.subr.mxu0 0.0
    %205 = vmatpush1.msra.mxu0 0.0
    %206 = vmatprep.subr.mxu0 0.0
    %207 = vmatpush1.msra.mxu0 0.0
    %208 = vmatprep.subr.mxu0 0.0
    %209 = vmatpush1.msra.mxu0 0.0
    %210 = vmatprep.subr.mxu0 0.0
    %211 = vmatpush1.msra.mxu0 0.0
    %212 = vmatprep.subr.mxu0 0.0
    %213 = vmatpush1.msra.mxu0 0.0
    %214 = vmatprep.subr.mxu0 0.0
    %215 = vmatpush1.msra.mxu0 0.0
    %216 = vmatprep.subr.mxu0 0.0
    %217 = vmatpush1.msra.mxu0 0.0
    %218 = vmatprep.subr.mxu0 0.0
    %219 = vmatpush1.msra.mxu0 0.0
    %220 = vmatprep.subr.mxu0 0.0
    %221 = vmatpush1.msra.mxu0 0.0
    %222 = vmatprep.subr.mxu0 0.0
    %223 = vmatpush1.msra.mxu0 0.0
    %224 = vmatprep.subr.mxu0 0.0
    %225 = vmatpush1.msra.mxu0 0.0
    %226 = vmatprep.mubr.f32.mxu0 0.0
    %227 = vmatmul.mubr.f32.gmra.mrb[0].mxu0 %v160
    %v228 = vpop.f32.mrb[0].mxu0
    %v229 = vadd.f32 %v155, %v228
    %v230 = vpop.f32.mrb[0].mxu0
    %231 = vdwg.mxu0
    %v232 = vld [vmem:[%s5] sm:$0x1]
    %v234 = vlaneseq
    %v235 = vshrl.u32 %v234, 7
    %v236 = vsub.s32 0, %v235
    %v237 = vrot.slane %v232, %v236
    %v239 = vadd.f32 %v229, %v237
    %v240 = vxor.u32 %v239, 2147483648
    %v241 = vmul.f32 %v240, 1.442695
    %v242 = vpow.pop %v241
    %v243 = vadd.f32 %v242, 1.0
    %v244 = vrcp.pop %v243
    %v245 = vmul.f32 1.0, %v244
    %v246 = vmul.f32 %v245, 2.0
    %v247 = vsub.f32 %v246, 1.0
    %249 = vrot.lane.b32.xlu0 %v245, 64
    %v250 = vpop.permute.xlu0 %249
    %v252 = vmul.f32 %v247, %v250
    %v253 = vld [vmem:[#allocation7] sm:$0xff]
    %255 = vrot.lane.b32.xlu0 %v253, 32
    %v256 = vpop.permute.xlu0 %255
    %v258 = vmul.f32 %v245, %v256
    %260 = vrot.lane.b32.xlu0 %v258, 32
    %v261 = vpop.permute.xlu0 %260
    %v263 = vadd.f32 %v252, %v261
    %v264 = vtanh.pop %v263
    %266 = vrot.lane.b32.xlu0 %v264, 32
    %v267 = vpop.permute.xlu0 %266
    %v269 = vmul.f32 %v245, %v267
    %271 = vrot.lane.b32.xlu0 %v269, 32
    %v272 = vpop.permute.xlu0 %271
    %274 = vst.msk [vmem:[#allocation10] sm:$0xff] %vm84, %v272
    %276 = vrot.lane.b32.xlu0 %v263, 64
    %v277 = vpop.permute.xlu0 %276
    %279 = vst.msk [vmem:[#allocation11] sm:$0xff] %vm84, %v277
    // Predicated region
    $region42: #{lstm_cell_forward.1} parent=1 // pred_check
      _
    $region43: #{lstm_cell_forward.1} parent=1 // pred_check_branch
      %281 = sbr.rel (0) target = $region45
    $region44: #{lstm_cell_forward.1} parent=1 // pred_region
      %s283 = ssub.s32 128, 128
      %284 = vsyncadd [#allocation4], %s283
      %s286 = sshll.u32 [#allocation10], 4
      %s287 = int_to_ptr.vmem [resolvable:$true] %s286
      %289 = dma.vmem_to_hbm [thread:$0]  %s287, 128, %s6, [#allocation4]
    $region45: #{lstm_cell_forward.1} parent=1 // pred_fallthru
      _
    // Predicated region
    $region46: #{lstm_cell_forward.1} parent=1 // pred_check
      _
    $region47: #{lstm_cell_forward.1} parent=1 // pred_check_branch
      %291 = sbr.rel (0) target = $region49
    $region48: #{lstm_cell_forward.1} parent=1 // pred_region
      %s293 = ssub.s32 128, 128
      %294 = vsyncadd [#allocation12], %s293
      %s296 = sshll.u32 [#allocation11], 4
      %s297 = int_to_ptr.vmem [resolvable:$true] %s296
      %299 = dma.vmem_to_hbm [thread:$0]  %s297, 128, %s7, [#allocation12]
    $region49: #{lstm_cell_forward.1} parent=1 // pred_fallthru
      _
    // Predicated region
    $region50: #{lstm_cell_forward.1} parent=1 // pred_check
      _
    $region51: #{lstm_cell_forward.1} parent=1 // pred_check_branch
      %301 = sbr.rel (0) target = $region53
    $region52: #{lstm_cell_forward.1} parent=1 // pred_region
      %302 = dma.done [#allocation4], 128
    $region53: #{lstm_cell_forward.1} parent=1 // pred_fallthru
      _
    // Predicated region
    $region54: #{lstm_cell_forward.1} parent=1 // pred_check
      _
    $region55: #{lstm_cell_forward.1} parent=1 // pred_check_branch
      %304 = sbr.rel (0) target = $region57
    $region56: #{lstm_cell_forward.1} parent=1 // pred_region
      %305 = dma.done [#allocation12], 128
    $region57: #{lstm_cell_forward.1} parent=1 // pred_fallthru
      _
    %306 = vsyncpa [#allocation3], 1
    %307 = vsyncpa [#allocation6], 1
    %308 = vsyncpa [#allocation9], 1
    %309 = vsyncpa [#allocation4], 1
    %310 = vsyncpa [#allocation12], 1

</llo_original>
